<compile_context>
chip_gen: v7x
topology: tpu7x:2x2x1
jax: 0.10.0
libtpu: 0.0.40
codegen_flags: <defaults>
</compile_context>

<pallas_src>
import math
import functools

import jax
import jax.numpy as jnp
from jax.experimental import pallas as pl
from jax.experimental.pallas import tpu as pltpu

# problem sizes (small, consistent with the module: a 3x3 "same" conv)
N, CIN, H, W = 2, 4, 16, 16
COUT, K, PAD = 8, 3, 1
LR_SCALE = 1.0


def _eq_conv_kernel(x_ref, w_ref, b_ref, o_ref, col_ref, *, k, wp, cin, out_pad):
    # x_ref:   (CIN, XW)            bf16, channel-major flattened padded input + zero halo
    # w_ref:   (COUT, CIN*K*K)      bf16, he_const*lr_scale already folded in
    # b_ref:   (COUT, 1)            f32 bias (broadcast along lanes)
    # o_ref:   (COUT, out_pad)      f32, lane-dense transposed output (cropped in wrapper)
    # col_ref: (CIN*K*K, out_pad)   bf16 VMEM scratch: in-kernel im2col (never hits HBM)
    #
    # Stage each 3x3 tap's shifted view once. For tap (i, j) the contribution to output
    # flat position o is x_flat[:, o + (i-PAD)*wp + (j-PAD)]; with a halo of PAD*wp+PAD
    # zeros on the left the slice start simplifies to i*wp + j. The lane realignment
    # happens here, once per tap, off the MXU feed path (Mosaic lowers it to an XLU-side
    # lane rotate; pltpu.roll would be the explicit equivalent).
    for i in range(k):
        for j in range(k):
            t = i * k + j
            start = i * wp + j                               # static offset
            col_ref[t * cin:(t + 1) * cin, :] = x_ref[:, start:start + out_pad]

    # Single MXU matmul: (COUT, 36) x (36, out_pad), bf16 operands, f32 accumulation.
    acc = jnp.dot(w_ref[...], col_ref[...], preferred_element_type=jnp.float32)

    # Scale already folded into the weights; epilogue is only the f32 bias add.
    o_ref[...] = (acc + b_ref[...]).astype(o_ref.dtype)


def equalized_conv2d(x_nchw, weight_oihw, bias, *, equalized=True, lr_scale=1.0):
    n, cin, h, w = x_nchw.shape
    cout, _, k, _ = weight_oihw.shape
    pad = (k - 1) // 2
    fan_in = cin * k * k                        # reduce(mul, weight.size()[1:], 1)
    scale = math.sqrt(2.0 / fan_in) * lr_scale if equalized else 1.0

    hp, wp = h + 2 * pad, w + 2 * pad
    out_len = n * hp * wp                       # meaningful output width (648 here)
    out_pad = ((out_len + 127) // 128) * 128    # lane-dense width (768): unmasked vregs
    halo = pad * wp + pad                       # left halo so every tap slice starts >= 0
    max_start = (k - 1) * wp + (k - 1)          # largest tap offset (38)
    xw = max(halo + out_len + halo, max_start + out_pad)
    xw = ((xw + 127) // 128) * 128              # padded input row width (896)

    # ---- layout glue (input-sized; the 9x im2col expansion never touches HBM) ----
    # NCHW -> (CIN, N, Hp, Wp) -> (CIN, N*Hp*Wp), plus zero halo/right-pad so every
    # in-kernel tap slice of width out_pad is in bounds. Garbage computed at padded-border
    # and pad-column output positions is cropped after the kernel.
    xt = jnp.transpose(x_nchw, (1, 0, 2, 3))
    xp = jnp.pad(xt, ((0, 0), (0, 0), (pad, pad), (pad, pad)))
    xflat = xp.reshape(cin, out_len)
    xhalo = jnp.pad(xflat, ((0, 0), (halo, xw - halo - out_len))).astype(jnp.bfloat16)

    # weight (O, I, kh, kw) -> (O, kh, kw, I) -> (O, K*K*I): column order matches im2col
    # row order (tap-major, channel-minor). Fold he_const * lr_scale into the weights.
    w36 = (jnp.transpose(weight_oihw, (0, 2, 3, 1)).reshape(cout, k * k * cin)
           * scale).astype(jnp.bfloat16)
    b2d = bias.reshape(cout, 1).astype(jnp.float32)

    kernel = functools.partial(_eq_conv_kernel, k=k, wp=wp, cin=cin, out_pad=out_pad)
    out_t = pl.pallas_call(
        kernel,
        out_shape=jax.ShapeDtypeStruct((cout, out_pad), jnp.float32),
        # No grid: single invocation, whole working set (< 0.5 MiB) resident in VMEM.
        in_specs=[
            pl.BlockSpec(memory_space=pltpu.MemorySpace.VMEM),
            pl.BlockSpec(memory_space=pltpu.MemorySpace.VMEM),
            pl.BlockSpec(memory_space=pltpu.MemorySpace.VMEM),
        ],
        out_specs=pl.BlockSpec(memory_space=pltpu.MemorySpace.VMEM),
        scratch_shapes=[pltpu.VMEM((cin * k * k, out_pad), jnp.bfloat16)],
    )(xhalo, w36, b2d)

    # (COUT, out_pad) -> drop lane pad -> crop the spatial pad border -> NCHW
    out = out_t[:, :out_len].reshape(cout, n, hp, wp)[:, :, pad:pad + h, pad:pad + w]
    return jnp.transpose(out, (1, 0, 2, 3))


if __name__ == "__main__":
    key = jax.random.PRNGKey(0)
    k_x, k_w, k_b = jax.random.split(key, 3)

    x = jax.random.normal(k_x, (N, CIN, H, W), dtype=jnp.float32)
    # Equalized.__init__: weight.normal_(0, 1) / lr_scale; bias is a (trainable) Parameter
    # initialized to zero. Use a nonzero bias so the broadcast-add path is exercised.
    weight = jax.random.normal(k_w, (COUT, CIN, K, K), dtype=jnp.float32) / LR_SCALE
    bias = 0.1 * jax.random.normal(k_b, (COUT,), dtype=jnp.float32)

    y = equalized_conv2d(x, weight, bias, equalized=True, lr_scale=LR_SCALE)
    y = jax.block_until_ready(y)
    assert y.shape == (N, COUT, H, W)

    he = math.sqrt(2.0 / (CIN * K * K)) * LR_SCALE

    # (1) Tight check against a reference at the kernel's compute precision:
    #     bf16-rounded activations and bf16-rounded pre-scaled weights, f32 accumulation.
    x_bf = x.astype(jnp.bfloat16).astype(jnp.float32)
    w_bf = (weight * he).astype(jnp.bfloat16).astype(jnp.float32)
    ref_bf = jax.lax.conv_general_dilated(
        x_bf, w_bf, window_strides=(1, 1), padding=((PAD, PAD), (PAD, PAD)),
        dimension_numbers=("NCHW", "OIHW", "NCHW")) + bias.reshape(1, -1, 1, 1)
    assert jnp.allclose(y, ref_bf, atol=2e-3, rtol=2e-3), "mismatch vs bf16-precision reference"

    # (2) Loose sanity check against the full-f32 module semantics (difference is only the
    #     bf16 input/weight rounding adopted per the perf review).
    ref_f32 = jax.lax.conv_general_dilated(
        x, weight, window_strides=(1, 1), padding=((PAD, PAD), (PAD, PAD)),
        dimension_numbers=("NCHW", "OIHW", "NCHW")) * he + bias.reshape(1, -1, 1, 1)
    assert jnp.allclose(y, ref_f32, atol=1e-1, rtol=1e-1), "mismatch vs f32 module semantics"

    print("KERNEL_OK")
</pallas_src>

<mosaic_0001>
module attributes {stable_mosaic.version = 11 : i64} {
  func.func @_eq_conv_kernel(%arg0: memref<4x896xbf16, #tpu.memory_space<vmem>>, %arg1: memref<8x36xbf16, #tpu.memory_space<vmem>>, %arg2: memref<8x1xf32, #tpu.memory_space<vmem>>, %arg3: memref<8x768xf32, #tpu.memory_space<vmem>>, %arg4: memref<36x768xbf16, #tpu.memory_space<vmem>>) attributes {dimension_semantics = [], scalar_prefetch = 0 : i64, scratch_operands = 1 : i64, tpu.core_type = #tpu.core_type<tc>} {
    %c0 = arith.constant 0 : index
    %c0_0 = arith.constant 0 : index
    %0 = vector.load %arg0[%c0, %c0_0] : memref<4x896xbf16, #tpu.memory_space<vmem>>, vector<4x768xbf16>
    %c0_1 = arith.constant 0 : index
    %c0_2 = arith.constant 0 : index
    %1 = vector.load %arg4[%c0_1, %c0_2] : memref<36x768xbf16, #tpu.memory_space<vmem>>, vector<4x768xbf16>
    tpu.vector_store %arg4[%c0_1, %c0_2], %0 {strides = array<i32>} : memref<36x768xbf16, #tpu.memory_space<vmem>>, vector<4x768xbf16>,
    %c0_3 = arith.constant 0 : index
    %c1 = arith.constant 1 : index
    %2 = vector.load %arg0[%c0_3, %c1] : memref<4x896xbf16, #tpu.memory_space<vmem>>, vector<4x768xbf16>
    %c4 = arith.constant 4 : index
    %c0_4 = arith.constant 0 : index
    %3 = vector.load %arg4[%c4, %c0_4] : memref<36x768xbf16, #tpu.memory_space<vmem>>, vector<4x768xbf16>
    tpu.vector_store %arg4[%c4, %c0_4], %2 {strides = array<i32>} : memref<36x768xbf16, #tpu.memory_space<vmem>>, vector<4x768xbf16>,
    %c0_5 = arith.constant 0 : index
    %c2 = arith.constant 2 : index
    %4 = vector.load %arg0[%c0_5, %c2] : memref<4x896xbf16, #tpu.memory_space<vmem>>, vector<4x768xbf16>
    %c8 = arith.constant 8 : index
    %c0_6 = arith.constant 0 : index
    %5 = vector.load %arg4[%c8, %c0_6] : memref<36x768xbf16, #tpu.memory_space<vmem>>, vector<4x768xbf16>
    tpu.vector_store %arg4[%c8, %c0_6], %4 {strides = array<i32>} : memref<36x768xbf16, #tpu.memory_space<vmem>>, vector<4x768xbf16>,
    %c0_7 = arith.constant 0 : index
    %c18 = arith.constant 18 : index
    %6 = vector.load %arg0[%c0_7, %c18] : memref<4x896xbf16, #tpu.memory_space<vmem>>, vector<4x768xbf16>
    %c12 = arith.constant 12 : index
    %c0_8 = arith.constant 0 : index
    %7 = vector.load %arg4[%c12, %c0_8] : memref<36x768xbf16, #tpu.memory_space<vmem>>, vector<4x768xbf16>
    tpu.vector_store %arg4[%c12, %c0_8], %6 {strides = array<i32>} : memref<36x768xbf16, #tpu.memory_space<vmem>>, vector<4x768xbf16>,
    %c0_9 = arith.constant 0 : index
    %c19 = arith.constant 19 : index
    %8 = vector.load %arg0[%c0_9, %c19] : memref<4x896xbf16, #tpu.memory_space<vmem>>, vector<4x768xbf16>
    %c16 = arith.constant 16 : index
    %c0_10 = arith.constant 0 : index
    %9 = vector.load %arg4[%c16, %c0_10] : memref<36x768xbf16, #tpu.memory_space<vmem>>, vector<4x768xbf16>
    tpu.vector_store %arg4[%c16, %c0_10], %8 {strides = array<i32>} : memref<36x768xbf16, #tpu.memory_space<vmem>>, vector<4x768xbf16>,
    %c0_11 = arith.constant 0 : index
    %c20 = arith.constant 20 : index
    %10 = vector.load %arg0[%c0_11, %c20] : memref<4x896xbf16, #tpu.memory_space<vmem>>, vector<4x768xbf16>
    %c20_12 = arith.constant 20 : index
    %c0_13 = arith.constant 0 : index
    %11 = vector.load %arg4[%c20_12, %c0_13] : memref<36x768xbf16, #tpu.memory_space<vmem>>, vector<4x768xbf16>
    tpu.vector_store %arg4[%c20_12, %c0_13], %10 {strides = array<i32>} : memref<36x768xbf16, #tpu.memory_space<vmem>>, vector<4x768xbf16>,
    %c0_14 = arith.constant 0 : index
    %c36 = arith.constant 36 : index
    %12 = vector.load %arg0[%c0_14, %c36] : memref<4x896xbf16, #tpu.memory_space<vmem>>, vector<4x768xbf16>
    %c24 = arith.constant 24 : index
    %c0_15 = arith.constant 0 : index
    %13 = vector.load %arg4[%c24, %c0_15] : memref<36x768xbf16, #tpu.memory_space<vmem>>, vector<4x768xbf16>
    tpu.vector_store %arg4[%c24, %c0_15], %12 {strides = array<i32>} : memref<36x768xbf16, #tpu.memory_space<vmem>>, vector<4x768xbf16>,
    %c0_16 = arith.constant 0 : index
    %c37 = arith.constant 37 : index
    %14 = vector.load %arg0[%c0_16, %c37] : memref<4x896xbf16, #tpu.memory_space<vmem>>, vector<4x768xbf16>
    %c28 = arith.constant 28 : index
    %c0_17 = arith.constant 0 : index
    %15 = vector.load %arg4[%c28, %c0_17] : memref<36x768xbf16, #tpu.memory_space<vmem>>, vector<4x768xbf16>
    tpu.vector_store %arg4[%c28, %c0_17], %14 {strides = array<i32>} : memref<36x768xbf16, #tpu.memory_space<vmem>>, vector<4x768xbf16>,
    %c0_18 = arith.constant 0 : index
    %c38 = arith.constant 38 : index
    %16 = vector.load %arg0[%c0_18, %c38] : memref<4x896xbf16, #tpu.memory_space<vmem>>, vector<4x768xbf16>
    %c32 = arith.constant 32 : index
    %c0_19 = arith.constant 0 : index
    %17 = vector.load %arg4[%c32, %c0_19] : memref<36x768xbf16, #tpu.memory_space<vmem>>, vector<4x768xbf16>
    tpu.vector_store %arg4[%c32, %c0_19], %16 {strides = array<i32>} : memref<36x768xbf16, #tpu.memory_space<vmem>>, vector<4x768xbf16>,
    %c0_20 = arith.constant 0 : index
    %c0_21 = arith.constant 0 : index
    %18 = vector.load %arg1[%c0_20, %c0_21] : memref<8x36xbf16, #tpu.memory_space<vmem>>, vector<8x36xbf16>
    %c0_22 = arith.constant 0 : index
    %c0_23 = arith.constant 0 : index
    %19 = vector.load %arg4[%c0_22, %c0_23] : memref<36x768xbf16, #tpu.memory_space<vmem>>, vector<36x768xbf16>
    %cst = arith.constant dense<0.000000e+00> : vector<8x768xf32>
    %20 = tpu.matmul %18, %19, %cst {dimension_numbers = #tpu.dot_dimension_numbers<[1], [0], [0], [1], [0, 0, 1, 1], [], []>} : vector<8x36xbf16>, vector<36x768xbf16>, vector<8x768xf32> -> vector<8x768xf32>
    %c0_24 = arith.constant 0 : index
    %c0_25 = arith.constant 0 : index
    %21 = vector.load %arg2[%c0_24, %c0_25] : memref<8x1xf32, #tpu.memory_space<vmem>>, vector<8x1xf32>
    %22 = vector.broadcast %21 : vector<8x1xf32> to vector<8x768xf32>
    %23 = arith.addf %20, %22 : vector<8x768xf32>
    %c0_26 = arith.constant 0 : index
    %c0_27 = arith.constant 0 : index
    %24 = vector.load %arg3[%c0_26, %c0_27] : memref<8x768xf32, #tpu.memory_space<vmem>>, vector<8x768xf32>
    tpu.vector_store %arg3[%c0_26, %c0_27], %23 {strides = array<i32>} : memref<8x768xf32, #tpu.memory_space<vmem>>, vector<8x768xf32>,
    return
  }
}

</mosaic_0001>

<llo_original>
// kernel: tpu_custom_call.1
$region0: #{tpu_custom_call.1}
  #allocation0 [shape = 'u32[]', space=smem, size = 0x4, offset = 0x4, fixed_abs, tag = 'smem constant byte address 0x4 - core index']
  #allocation1 [shape = 'u32[144,128]{1,0:T(1,128)}', space=vmem, size = 0x12000, scoped, tag = 'internal scratch']
  #allocation2 [shape = 'bf16[36,768]{1,0:T(8,128)(2,1)}', space=vmem, size = 0xf000, scoped, tag = 'scratch operand']
  %s0 = inlined_call_operand.hbm [shape: bf16[4,896], index: 0, kind: input, shape index: {}]
  %s1 = inlined_call_operand.vmem [shape: bf16[8,36], index: 1, kind: input, shape index: {}]
  %s2 = inlined_call_operand.vmem [shape: f32[8,1], index: 2, kind: input, shape index: {}]
  %s3 = inlined_call_operand.hbm [shape: f32[8,768], index: 3, kind: output, shape index: {}]
  %s4 = sld [smem:[#allocation0]]
  $region26: #{tpu_custom_call.1} parent=0
    _
  %s6 = ssub.s32 1, %s4
  %s7 = scalar_select 0, %s6, %s4
  $region1: #{tpu_custom_call.1} parent=0
    #allocation3 [shape = 'u8[7168]{0}', space=vmem, size = 0x1c00, scoped, tag = 'input window, operand 0, single buffered']
    #allocation4 [shape = 's32[1]{0}', space=sflag, size = 0x4, scoped, tag = 'scoped memory for tpu_custom_call.1']
    #allocation5 [shape = 's32[1]{0}', space=sflag, size = 0x4, scoped, tag = 'scoped memory for tpu_custom_call.1']
    #allocation6 [shape = 'u8[24576]{0}', space=vmem, size = 0x6000, scoped, tag = 'output window, operand 0, single buffered']
    %8 = vsyncpa [#allocation4], 0
    %9 = vsyncpa [#allocation5], 0
    // Predicated region
    $region2: #{tpu_custom_call.1} parent=1 // pred_check
      _
    $region3: #{tpu_custom_call.1} parent=1 // pred_check_branch
      %11 = sbr.rel (0) target = $region5
    $region4: #{tpu_custom_call.1} parent=1 // pred_region
      %s13 = ssub.s32 224, 224
      %14 = vsyncadd [#allocation4], %s13
      %s16 = sshll.u32 [#allocation3], 4
      %s17 = int_to_ptr.vmem [resolvable:$true] %s16
      %19 = dma.hbm_to_vmem [thread:$0]  %s0, 224, %s17, [#allocation4]
    $region5: #{tpu_custom_call.1} parent=1 // pred_fallthru
      _
    // Predicated region
    $region6: #{tpu_custom_call.1} parent=1 // pred_check
      _
    $region7: #{tpu_custom_call.1} parent=1 // pred_check_branch
      %21 = sbr.rel (0) target = $region9
    $region8: #{tpu_custom_call.1} parent=1 // pred_region
      _
    $region9: #{tpu_custom_call.1} parent=1 // pred_fallthru
      _
    // Predicated region
    $region10: #{tpu_custom_call.1} parent=1 // pred_check
      _
    $region11: #{tpu_custom_call.1} parent=1 // pred_check_branch
      %23 = sbr.rel (0) target = $region13
    $region12: #{tpu_custom_call.1} parent=1 // pred_region
      _
    $region13: #{tpu_custom_call.1} parent=1 // pred_fallthru
      _
    // Predicated region
    $region14: #{tpu_custom_call.1} parent=1 // pred_check
      _
    $region15: #{tpu_custom_call.1} parent=1 // pred_check_branch
      %25 = sbr.rel (0) target = $region17
    $region16: #{tpu_custom_call.1} parent=1 // pred_region
      %26 = dma.done [#allocation4], 224
    $region17: #{tpu_custom_call.1} parent=1 // pred_fallthru
      _
    %v28 = vld [vmem:[#allocation3] sm:$0xff]
    %v29 = vld [vmem:[#allocation3 + $0x8] sm:$0xf]
    %v32 = vcombine.high %v28, %v28
    %v34 = vunpack.c.l.s4 1983009808
    %v35 = vunpack.c.0.s8 %v34
    %v36 = vlaneseq
    %v37 = vshrl.u32 %v36, 7
    %v38 = vsub.s32 %v35, %v37
    %v39 = vrot.slane %v28, %v38
    %v41 = vunpack.c.l.s4 1983009808
    %v42 = vunpack.c.0.s8 %v41
    %v43 = vlaneseq
    %v44 = vshrl.u32 %v43, 7
    %v45 = vsub.s32 %v42, %v44
    %v46 = vrot.slane %v32, %v45
    %v48 = vunpack.c.l.s4 1983009808
    %v49 = vunpack.c.0.s8 %v48
    %v50 = vlaneseq
    %v51 = vshrl.u32 %v50, 7
    %v52 = vsub.s32 %v49, %v51
    %v53 = vrot.slane %v29, %v52
    %57 = vst [vmem:[#allocation2] sm:$0x33] %v39
    %58 = vst [vmem:[#allocation2 + $0x8] sm:$0x33] %v46
    %59 = vst [vmem:[#allocation2 + $0x10] sm:$0x33] %v53
    %v60 = vld [vmem:[#allocation3] sm:$0xff]
    %v61 = vld [vmem:[#allocation3 + $0x8] sm:$0x3f]
    %v64 = vcombine.low %v60, %v60
    %v66 = vunpack.c.l.s4 1983009808
    %v67 = vunpack.c.0.s8 %v66
    %v68 = vlaneseq
    %v69 = vshrl.u32 %v68, 7
    %v70 = vsub.s32 %v67, %v69
    %v71 = vrot.slane %v64, %v70
    %v73 = vunpack.c.l.s4 1983009808
    %v74 = vunpack.c.0.s8 %v73
    %v75 = vlaneseq
    %v76 = vshrl.u32 %v75, 7
    %v77 = vsub.s32 %v74, %v76
    %v78 = vrot.slane %v60, %v77
    %v79 = vcombine.low %v61, %v61
    %v81 = vunpack.c.l.s4 1983009808
    %v82 = vunpack.c.0.s8 %v81
    %v83 = vlaneseq
    %v84 = vshrl.u32 %v83, 7
    %v85 = vsub.s32 %v82, %v84
    %v86 = vrot.slane %v79, %v85
    %v88 = vunpack.c.l.s4 1983009808
    %v89 = vunpack.c.0.s8 %v88
    %v90 = vlaneseq
    %v91 = vshrl.u32 %v90, 7
    %v92 = vsub.s32 %v89, %v91
    %v93 = vrot.slane %v61, %v92
    %94 = vrot.lane.b32.xlu0 %v71, 127
    %v95 = vpop.permute.xlu0 %94
    %96 = vrot.lane.b32.xlu0 %v78, 127
    %v97 = vpop.permute.xlu0 %96
    %98 = vrot.lane.b32.xlu0 %v86, 127
    %v99 = vpop.permute.xlu0 %98
    %100 = vrot.lane.b32.xlu0 %v93, 127
    %v101 = vpop.permute.xlu0 %100
    %v102 = vrot.slane %v95, 4
    %v103 = vrot.slane %v97, 4
    %v104 = vrot.slane %v99, 4
    %v105 = vrot.slane %v101, 4
    %vm106 = vcmask 1043456
    %v107 = vsel %vm106, %v102, %v103
    %vm108 = vcmask 1039360
    %v109 = vsel %vm108, %v95, %v107
    %v110 = vsel %vm106, %v103, %v104
    %v111 = vsel %vm108, %v97, %v110
    %v112 = vsel %vm106, %v104, %v105
    %v113 = vsel %vm108, %v99, %v112
    %117 = vst [vmem:[#allocation2] sm:$0xcc] %v109
    %118 = vst [vmem:[#allocation2 + $0x8] sm:$0xcc] %v111
    %119 = vst [vmem:[#allocation2 + $0x10] sm:$0xcc] %v113
    %v120 = vld [vmem:[#allocation3] sm:$0xff]
    %v121 = vld [vmem:[#allocation3 + $0x8] sm:$0x3f]
    %v124 = vcombine.high %v120, %v120
    %v126 = vunpack.c.l.s4 1983009808
    %v127 = vunpack.c.0.s8 %v126
    %v128 = vlaneseq
    %v129 = vshrl.u32 %v128, 7
    %v130 = vsub.s32 %v127, %v129
    %v131 = vrot.slane %v120, %v130
    %v133 = vunpack.c.l.s4 1983009808
    %v134 = vunpack.c.0.s8 %v133
    %v135 = vlaneseq
    %v136 = vshrl.u32 %v135, 7
    %v137 = vsub.s32 %v134, %v136
    %v138 = vrot.slane %v124, %v137
    %v139 = vcombine.high %v121, %v121
    %v141 = vunpack.c.l.s4 1983009808
    %v142 = vunpack.c.0.s8 %v141
    %v143 = vlaneseq
    %v144 = vshrl.u32 %v143, 7
    %v145 = vsub.s32 %v142, %v144
    %v146 = vrot.slane %v121, %v145
    %v148 = vunpack.c.l.s4 1983009808
    %v149 = vunpack.c.0.s8 %v148
    %v150 = vlaneseq
    %v151 = vshrl.u32 %v150, 7
    %v152 = vsub.s32 %v149, %v151
    %v153 = vrot.slane %v139, %v152
    %154 = vrot.lane.b32.xlu0 %v131, 126
    %v155 = vpop.permute.xlu0 %154
    %156 = vrot.lane.b32.xlu0 %v138, 126
    %v157 = vpop.permute.xlu0 %156
    %158 = vrot.lane.b32.xlu0 %v146, 126
    %v159 = vpop.permute.xlu0 %158
    %160 = vrot.lane.b32.xlu0 %v153, 126
    %v161 = vpop.permute.xlu0 %160
    %v162 = vrot.slane %v155, 4
    %v163 = vrot.slane %v157, 4
    %v164 = vrot.slane %v159, 4
    %v165 = vrot.slane %v161, 4
    %v166 = vsel %vm106, %v162, %v163
    %vm167 = vcmask 1031168
    %v168 = vsel %vm167, %v155, %v166
    %v169 = vsel %vm106, %v163, %v164
    %v170 = vsel %vm167, %v157, %v169
    %v171 = vsel %vm106, %v164, %v165
    %v172 = vsel %vm167, %v159, %v171
    %176 = vst [vmem:[#allocation2 + $0x18] sm:$0x33] %v168
    %177 = vst [vmem:[#allocation2 + $0x20] sm:$0x33] %v170
    %178 = vst [vmem:[#allocation2 + $0x28] sm:$0x33] %v172
    %v179 = vld [vmem:[#allocation3] sm:$0xff]
    %v180 = vld [vmem:[#allocation3 + $0x8] sm:$0x3f]
    %v183 = vcombine.low %v179, %v179
    %v185 = vunpack.c.l.s4 1983009808
    %v186 = vunpack.c.0.s8 %v185
    %v187 = vlaneseq
    %v188 = vshrl.u32 %v187, 7
    %v189 = vsub.s32 %v186, %v188
    %v190 = vrot.slane %v183, %v189
    %v192 = vunpack.c.l.s4 1983009808
    %v193 = vunpack.c.0.s8 %v192
    %v194 = vlaneseq
    %v195 = vshrl.u32 %v194, 7
    %v196 = vsub.s32 %v193, %v195
    %v197 = vrot.slane %v179, %v196
    %v198 = vcombine.low %v180, %v180
    %v200 = vunpack.c.l.s4 1983009808
    %v201 = vunpack.c.0.s8 %v200
    %v202 = vlaneseq
    %v203 = vshrl.u32 %v202, 7
    %v204 = vsub.s32 %v201, %v203
    %v205 = vrot.slane %v198, %v204
    %v207 = vunpack.c.l.s4 1983009808
    %v208 = vunpack.c.0.s8 %v207
    %v209 = vlaneseq
    %v210 = vshrl.u32 %v209, 7
    %v211 = vsub.s32 %v208, %v210
    %v212 = vrot.slane %v180, %v211
    %213 = vrot.lane.b32.xlu0 %v190, 110
    %v214 = vpop.permute.xlu0 %213
    %215 = vrot.lane.b32.xlu0 %v197, 110
    %v216 = vpop.permute.xlu0 %215
    %217 = vrot.lane.b32.xlu0 %v205, 110
    %v218 = vpop.permute.xlu0 %217
    %219 = vrot.lane.b32.xlu0 %v212, 110
    %v220 = vpop.permute.xlu0 %219
    %v221 = vrot.slane %v214, 4
    %v222 = vrot.slane %v216, 4
    %v223 = vrot.slane %v218, 4
    %v224 = vrot.slane %v220, 4
    %v225 = vsel %vm106, %v221, %v222
    %vm226 = vcmask 900096
    %v227 = vsel %vm226, %v214, %v225
    %v228 = vsel %vm106, %v222, %v223
    %v229 = vsel %vm226, %v216, %v228
    %v230 = vsel %vm106, %v223, %v224
    %v231 = vsel %vm226, %v218, %v230
    %235 = vst [vmem:[#allocation2 + $0x18] sm:$0xcc] %v227
    %236 = vst [vmem:[#allocation2 + $0x20] sm:$0xcc] %v229
    %237 = vst [vmem:[#allocation2 + $0x28] sm:$0xcc] %v231
    %v238 = vld [vmem:[#allocation3] sm:$0xff]
    %v239 = vld [vmem:[#allocation3 + $0x8] sm:$0x3f]
    %v242 = vcombine.high %v238, %v238
    %v244 = vunpack.c.l.s4 1983009808
    %v245 = vunpack.c.0.s8 %v244
    %v246 = vlaneseq
    %v247 = vshrl.u32 %v246, 7
    %v248 = vsub.s32 %v245, %v247
    %v249 = vrot.slane %v238, %v248
    %v251 = vunpack.c.l.s4 1983009808
    %v252 = vunpack.c.0.s8 %v251
    %v253 = vlaneseq
    %v254 = vshrl.u32 %v253, 7
    %v255 = vsub.s32 %v252, %v254
    %v256 = vrot.slane %v242, %v255
    %v257 = vcombine.high %v239, %v239
    %v259 = vunpack.c.l.s4 1983009808
    %v260 = vunpack.c.0.s8 %v259
    %v261 = vlaneseq
    %v262 = vshrl.u32 %v261, 7
    %v263 = vsub.s32 %v260, %v262
    %v264 = vrot.slane %v239, %v263
    %v266 = vunpack.c.l.s4 1983009808
    %v267 = vunpack.c.0.s8 %v266
    %v268 = vlaneseq
    %v269 = vshrl.u32 %v268, 7
    %v270 = vsub.s32 %v267, %v269
    %v271 = vrot.slane %v257, %v270
    %272 = vrot.lane.b32.xlu0 %v249, 109
    %v273 = vpop.permute.xlu0 %272
    %274 = vrot.lane.b32.xlu0 %v256, 109
    %v275 = vpop.permute.xlu0 %274
    %276 = vrot.lane.b32.xlu0 %v264, 109
    %v277 = vpop.permute.xlu0 %276
    %278 = vrot.lane.b32.xlu0 %v271, 109
    %v279 = vpop.permute.xlu0 %278
    %v280 = vrot.slane %v273, 4
    %v281 = vrot.slane %v275, 4
    %v282 = vrot.slane %v277, 4
    %v283 = vrot.slane %v279, 4
    %v284 = vsel %vm106, %v280, %v281
    %vm285 = vcmask 891904
    %v286 = vsel %vm285, %v273, %v284
    %v287 = vsel %vm106, %v281, %v282
    %v288 = vsel %vm285, %v275, %v287
    %v289 = vsel %vm106, %v282, %v283
    %v290 = vsel %vm285, %v277, %v289
    %294 = vst [vmem:[#allocation2 + $0x30] sm:$0x33] %v286
    %295 = vst [vmem:[#allocation2 + $0x38] sm:$0x33] %v288
    %296 = vst [vmem:[#allocation2 + $0x40] sm:$0x33] %v290
    %v297 = vld [vmem:[#allocation3] sm:$0xff]
    %v298 = vld [vmem:[#allocation3 + $0x8] sm:$0x3f]
    %v301 = vcombine.low %v297, %v297
    %v303 = vunpack.c.l.s4 1983009808
    %v304 = vunpack.c.0.s8 %v303
    %v305 = vlaneseq
    %v306 = vshrl.u32 %v305, 7
    %v307 = vsub.s32 %v304, %v306
    %v308 = vrot.slane %v301, %v307
    %v310 = vunpack.c.l.s4 1983009808
    %v311 = vunpack.c.0.s8 %v310
    %v312 = vlaneseq
    %v313 = vshrl.u32 %v312, 7
    %v314 = vsub.s32 %v311, %v313
    %v315 = vrot.slane %v297, %v314
    %v316 = vcombine.low %v298, %v298
    %v318 = vunpack.c.l.s4 1983009808
    %v319 = vunpack.c.0.s8 %v318
    %v320 = vlaneseq
    %v321 = vshrl.u32 %v320, 7
    %v322 = vsub.s32 %v319, %v321
    %v323 = vrot.slane %v316, %v322
    %v325 = vunpack.c.l.s4 1983009808
    %v326 = vunpack.c.0.s8 %v325
    %v327 = vlaneseq
    %v328 = vshrl.u32 %v327, 7
    %v329 = vsub.s32 %v326, %v328
    %v330 = vrot.slane %v298, %v329
    %331 = vrot.lane.b32.xlu0 %v308, 108
    %v332 = vpop.permute.xlu0 %331
    %333 = vrot.lane.b32.xlu0 %v315, 108
    %v334 = vpop.permute.xlu0 %333
    %335 = vrot.lane.b32.xlu0 %v323, 108
    %v336 = vpop.permute.xlu0 %335
    %337 = vrot.lane.b32.xlu0 %v330, 108
    %v338 = vpop.permute.xlu0 %337
    %v339 = vrot.slane %v332, 4
    %v340 = vrot.slane %v334, 4
    %v341 = vrot.slane %v336, 4
    %v342 = vrot.slane %v338, 4
    %v343 = vsel %vm106, %v339, %v340
    %vm344 = vcmask 883712
    %v345 = vsel %vm344, %v332, %v343
    %v346 = vsel %vm106, %v340, %v341
    %v347 = vsel %vm344, %v334, %v346
    %v348 = vsel %vm106, %v341, %v342
    %v349 = vsel %vm344, %v336, %v348
    %353 = vst [vmem:[#allocation2 + $0x30] sm:$0xcc] %v345
    %354 = vst [vmem:[#allocation2 + $0x38] sm:$0xcc] %v347
    %355 = vst [vmem:[#allocation2 + $0x40] sm:$0xcc] %v349
    %v356 = vld [vmem:[#allocation3] sm:$0xff]
    %v357 = vld [vmem:[#allocation3 + $0x8] sm:$0x3f]
    %v360 = vcombine.high %v356, %v356
    %v362 = vunpack.c.l.s4 1983009808
    %v363 = vunpack.c.0.s8 %v362
    %v364 = vlaneseq
    %v365 = vshrl.u32 %v364, 7
    %v366 = vsub.s32 %v363, %v365
    %v367 = vrot.slane %v356, %v366
    %v369 = vunpack.c.l.s4 1983009808
    %v370 = vunpack.c.0.s8 %v369
    %v371 = vlaneseq
    %v372 = vshrl.u32 %v371, 7
    %v373 = vsub.s32 %v370, %v372
    %v374 = vrot.slane %v360, %v373
    %v375 = vcombine.high %v357, %v357
    %v377 = vunpack.c.l.s4 1983009808
    %v378 = vunpack.c.0.s8 %v377
    %v379 = vlaneseq
    %v380 = vshrl.u32 %v379, 7
    %v381 = vsub.s32 %v378, %v380
    %v382 = vrot.slane %v357, %v381
    %v384 = vunpack.c.l.s4 1983009808
    %v385 = vunpack.c.0.s8 %v384
    %v386 = vlaneseq
    %v387 = vshrl.u32 %v386, 7
    %v388 = vsub.s32 %v385, %v387
    %v389 = vrot.slane %v375, %v388
    %390 = vrot.lane.b32.xlu0 %v367, 92
    %v391 = vpop.permute.xlu0 %390
    %392 = vrot.lane.b32.xlu0 %v374, 92
    %v393 = vpop.permute.xlu0 %392
    %394 = vrot.lane.b32.xlu0 %v382, 92
    %v395 = vpop.permute.xlu0 %394
    %396 = vrot.lane.b32.xlu0 %v389, 92
    %v397 = vpop.permute.xlu0 %396
    %v398 = vrot.slane %v391, 4
    %v399 = vrot.slane %v393, 4
    %v400 = vrot.slane %v395, 4
    %v401 = vrot.slane %v397, 4
    %v402 = vsel %vm106, %v398, %v399
    %vm403 = vcmask 752640
    %v404 = vsel %vm403, %v391, %v402
    %v405 = vsel %vm106, %v399, %v400
    %v406 = vsel %vm403, %v393, %v405
    %v407 = vsel %vm106, %v400, %v401
    %v408 = vsel %vm403, %v395, %v407
    %412 = vst [vmem:[#allocation2 + $0x48] sm:$0x33] %v404
    %413 = vst [vmem:[#allocation2 + $0x50] sm:$0x33] %v406
    %414 = vst [vmem:[#allocation2 + $0x58] sm:$0x33] %v408
    %v415 = vld [vmem:[#allocation3] sm:$0xff]
    %v416 = vld [vmem:[#allocation3 + $0x8] sm:$0x3f]
    %v419 = vcombine.low %v415, %v415
    %v421 = vunpack.c.l.s4 1983009808
    %v422 = vunpack.c.0.s8 %v421
    %v423 = vlaneseq
    %v424 = vshrl.u32 %v423, 7
    %v425 = vsub.s32 %v422, %v424
    %v426 = vrot.slane %v419, %v425
    %v428 = vunpack.c.l.s4 1983009808
    %v429 = vunpack.c.0.s8 %v428
    %v430 = vlaneseq
    %v431 = vshrl.u32 %v430, 7
    %v432 = vsub.s32 %v429, %v431
    %v433 = vrot.slane %v415, %v432
    %v434 = vcombine.low %v416, %v416
    %v436 = vunpack.c.l.s4 1983009808
    %v437 = vunpack.c.0.s8 %v436
    %v438 = vlaneseq
    %v439 = vshrl.u32 %v438, 7
    %v440 = vsub.s32 %v437, %v439
    %v441 = vrot.slane %v434, %v440
    %v443 = vunpack.c.l.s4 1983009808
    %v444 = vunpack.c.0.s8 %v443
    %v445 = vlaneseq
    %v446 = vshrl.u32 %v445, 7
    %v447 = vsub.s32 %v444, %v446
    %v448 = vrot.slane %v416, %v447
    %449 = vrot.lane.b32.xlu0 %v426, 91
    %v450 = vpop.permute.xlu0 %449
    %451 = vrot.lane.b32.xlu0 %v433, 91
    %v452 = vpop.permute.xlu0 %451
    %453 = vrot.lane.b32.xlu0 %v441, 91
    %v454 = vpop.permute.xlu0 %453
    %455 = vrot.lane.b32.xlu0 %v448, 91
    %v456 = vpop.permute.xlu0 %455
    %v457 = vrot.slane %v450, 4
    %v458 = vrot.slane %v452, 4
    %v459 = vrot.slane %v454, 4
    %v460 = vrot.slane %v456, 4
    %v461 = vsel %vm106, %v457, %v458
    %vm462 = vcmask 744448
    %v463 = vsel %vm462, %v450, %v461
    %v464 = vsel %vm106, %v458, %v459
    %v465 = vsel %vm462, %v452, %v464
    %v466 = vsel %vm106, %v459, %v460
    %v467 = vsel %vm462, %v454, %v466
    %471 = vst [vmem:[#allocation2 + $0x48] sm:$0xcc] %v463
    %472 = vst [vmem:[#allocation2 + $0x50] sm:$0xcc] %v465
    %473 = vst [vmem:[#allocation2 + $0x58] sm:$0xcc] %v467
    %v474 = vld [vmem:[#allocation3] sm:$0xff]
    %v475 = vld [vmem:[#allocation3 + $0x8] sm:$0x3f]
    %v478 = vcombine.high %v474, %v474
    %v480 = vunpack.c.l.s4 1983009808
    %v481 = vunpack.c.0.s8 %v480
    %v482 = vlaneseq
    %v483 = vshrl.u32 %v482, 7
    %v484 = vsub.s32 %v481, %v483
    %v485 = vrot.slane %v474, %v484
    %v487 = vunpack.c.l.s4 1983009808
    %v488 = vunpack.c.0.s8 %v487
    %v489 = vlaneseq
    %v490 = vshrl.u32 %v489, 7
    %v491 = vsub.s32 %v488, %v490
    %v492 = vrot.slane %v478, %v491
    %v493 = vcombine.high %v475, %v475
    %v495 = vunpack.c.l.s4 1983009808
    %v496 = vunpack.c.0.s8 %v495
    %v497 = vlaneseq
    %v498 = vshrl.u32 %v497, 7
    %v499 = vsub.s32 %v496, %v498
    %v500 = vrot.slane %v475, %v499
    %v502 = vunpack.c.l.s4 1983009808
    %v503 = vunpack.c.0.s8 %v502
    %v504 = vlaneseq
    %v505 = vshrl.u32 %v504, 7
    %v506 = vsub.s32 %v503, %v505
    %v507 = vrot.slane %v493, %v506
    %508 = vrot.lane.b32.xlu0 %v485, 90
    %v509 = vpop.permute.xlu0 %508
    %510 = vrot.lane.b32.xlu0 %v492, 90
    %v511 = vpop.permute.xlu0 %510
    %512 = vrot.lane.b32.xlu0 %v500, 90
    %v513 = vpop.permute.xlu0 %512
    %514 = vrot.lane.b32.xlu0 %v507, 90
    %v515 = vpop.permute.xlu0 %514
    %v516 = vrot.slane %v509, 4
    %v517 = vrot.slane %v511, 4
    %v518 = vrot.slane %v513, 4
    %v519 = vrot.slane %v515, 4
    %v520 = vsel %vm106, %v516, %v517
    %vm521 = vcmask 736256
    %v522 = vsel %vm521, %v509, %v520
    %v523 = vsel %vm106, %v517, %v518
    %v524 = vsel %vm521, %v511, %v523
    %v525 = vsel %vm106, %v518, %v519
    %v526 = vsel %vm521, %v513, %v525
    %530 = vst [vmem:[#allocation2 + $0x60] sm:$0x33] %v522
    %531 = vst [vmem:[#allocation2 + $0x68] sm:$0x33] %v524
    %532 = vst [vmem:[#allocation2 + $0x70] sm:$0x33] %v526
    %v533 = vld [vmem:[%s1] sm:$0xf]
    %v534 = vld [vmem:[#allocation2] sm:$0xff]
    %v535 = vld [vmem:[#allocation2 + $0x8] sm:$0xff]
    %v536 = vld [vmem:[#allocation2 + $0x10] sm:$0xff]
    %v537 = vld [vmem:[#allocation2 + $0x18] sm:$0xff]
    %v538 = vld [vmem:[#allocation2 + $0x20] sm:$0xff]
    %v539 = vld [vmem:[#allocation2 + $0x28] sm:$0xff]
    %v540 = vld [vmem:[#allocation2 + $0x30] sm:$0xff]
    %v541 = vld [vmem:[#allocation2 + $0x38] sm:$0xff]
    %v542 = vld [vmem:[#allocation2 + $0x40] sm:$0xff]
    %v543 = vld [vmem:[#allocation2 + $0x48] sm:$0xff]
    %v544 = vld [vmem:[#allocation2 + $0x50] sm:$0xff]
    %v545 = vld [vmem:[#allocation2 + $0x58] sm:$0xff]
    %v546 = vld [vmem:[#allocation2 + $0x60] sm:$0x33]
    %v547 = vld [vmem:[#allocation2 + $0x68] sm:$0x33]
    %v548 = vld [vmem:[#allocation2 + $0x70] sm:$0x33]
    %v549 = vld [vmem:[%s2] sm:$0xff]
    %551 = vset.pattern.permute.xlu0 0
    %552 = vperm.xlu0 %551, %v549
    %v553 = vpop.permute.xlu0 %552
    %v570 = vunpack.c.l.b16 %v534
    %v571 = vunpack.c.h.b16 %v534
    %v572 = vunpack.c.l.b16 %v535
    %v573 = vunpack.c.h.b16 %v535
    %v574 = vunpack.c.l.b16 %v536
    %v575 = vunpack.c.h.b16 %v536
    %v576 = vunpack.c.l.b16 %v537
    %v577 = vunpack.c.h.b16 %v537
    %v578 = vunpack.c.l.b16 %v538
    %v579 = vunpack.c.h.b16 %v538
    %v580 = vunpack.c.l.b16 %v539
    %v581 = vunpack.c.h.b16 %v539
    %v582 = vunpack.c.l.b16 %v540
    %v583 = vunpack.c.h.b16 %v540
    %v584 = vunpack.c.l.b16 %v541
    %v585 = vunpack.c.h.b16 %v541
    %v586 = vunpack.c.l.b16 %v542
    %v587 = vunpack.c.h.b16 %v542
    %v588 = vunpack.c.l.b16 %v543
    %v589 = vunpack.c.h.b16 %v543
    %v590 = vunpack.c.l.b16 %v544
    %v591 = vunpack.c.h.b16 %v544
    %v592 = vunpack.c.l.b16 %v545
    %v593 = vunpack.c.h.b16 %v545
    %v594 = vunpack.c.l.b16 %v546
    %v595 = vunpack.c.h.b16 %v546
    %v596 = vunpack.c.l.b16 %v547
    %v597 = vunpack.c.h.b16 %v547
    %v598 = vunpack.c.l.b16 %v548
    %v599 = vunpack.c.h.b16 %v548
    %v600 = vpack.c.b16 %v576, %v570
    %v601 = vpack.c.b16 %v577, %v571
    %v602 = vpack.c.b16 %v578, %v572
    %v603 = vpack.c.b16 %v579, %v573
    %v604 = vpack.c.b16 %v580, %v574
    %v605 = vpack.c.b16 %v581, %v575
    %v606 = vpack.c.b16 %v588, %v582
    %v607 = vpack.c.b16 %v589, %v583
    %v608 = vpack.c.b16 %v590, %v584
    %v609 = vpack.c.b16 %v591, %v585
    %v610 = vpack.c.b16 %v592, %v586
    %v611 = vpack.c.b16 %v593, %v587
    %v612 = vpack.c.b16 %v594, %v594
    %v613 = vpack.c.b16 %v595, %v595
    %v614 = vpack.c.b16 %v596, %v596
    %v615 = vpack.c.b16 %v597, %v597
    %v616 = vpack.c.b16 %v598, %v598
    %v617 = vpack.c.b16 %v599, %v599
    %vm630 = vcmask 293888
    %v632 = vsel %vm630, %v533, 0
    %vm634 = vcmask 1041408
    %v636 = vsel %vm634, %v612, 0
    %v639 = vsel %vm634, %v613, 0
    %v642 = vsel %vm634, %v614, 0
    %v645 = vsel %vm634, %v615, 0
    %v648 = vsel %vm634, %v616, 0
    %v651 = vsel %vm634, %v617, 0
    %653 = vmatprep.subr.bf16.mxu0 %v601
    %654 = vmatpush1.bf16.msra.mxu0 %v600
    %655 = vmatprep.subr.bf16.mxu0 %v607
    %656 = vmatpush1.bf16.msra.mxu0 %v606
    %657 = vmatprep.subr.bf16.mxu0 %v639
    %658 = vmatpush1.bf16.msra.mxu0 %v636
    %659 = vmatprep.subr.bf16.mxu0 0
    %660 = vmatpush1.bf16.msra.mxu0 0
    %661 = vmatprep.subr.bf16.mxu0 0
    %662 = vmatpush1.bf16.msra.mxu0 0
    %663 = vmatprep.subr.bf16.mxu0 0
    %664 = vmatpush1.bf16.msra.mxu0 0
    %665 = vmatprep.subr.bf16.mxu0 0
    %666 = vmatpush1.bf16.msra.mxu0 0
    %667 = vmatprep.subr.bf16.mxu0 0
    %668 = vmatpush1.bf16.msra.mxu0 0
    %669 = vmatprep.subr.bf16.mxu0 0
    %670 = vmatpush1.bf16.msra.mxu0 0
    %671 = vmatprep.subr.bf16.mxu0 0
    %672 = vmatpush1.bf16.msra.mxu0 0
    %673 = vmatprep.subr.bf16.mxu0 0
    %674 = vmatpush1.bf16.msra.mxu0 0
    %675 = vmatprep.subr.bf16.mxu0 0
    %676 = vmatpush1.bf16.msra.mxu0 0
    %677 = vmatprep.subr.bf16.mxu0 0
    %678 = vmatpush1.bf16.msra.mxu0 0
    %679 = vmatprep.subr.bf16.mxu0 0
    %680 = vmatpush1.bf16.msra.mxu0 0
    %681 = vmatprep.subr.bf16.mxu0 0
    %682 = vmatpush1.bf16.msra.mxu0 0
    %683 = vmatprep.subr.bf16.mxu0 0
    %684 = vmatpush1.bf16.msra.mxu0 0
    %685 = vmatprep.mubr.bf16.mxu0 0
    %686 = vmatmul.mubr.bf16.gmra.mrb[0].mxu0 %v632
    %v687 = vpop.f32.mrb[0].mxu0
    %v688 = vadd.f32 %v553, %v687
    %v689 = vpop.f32.mrb[0].mxu0
    %v690 = vadd.f32 %v553, %v689
    %v691 = vpop.f32.mrb[0].mxu0
    %v692 = vpop.f32.mrb[0].mxu0
    %693 = vdwg.mxu0
    %694 = vmatprep.subr.bf16.mxu0 %v603
    %695 = vmatpush1.bf16.msra.mxu0 %v602
    %696 = vmatprep.subr.bf16.mxu0 %v609
    %697 = vmatpush1.bf16.msra.mxu0 %v608
    %698 = vmatprep.subr.bf16.mxu0 %v645
    %699 = vmatpush1.bf16.msra.mxu0 %v642
    %700 = vmatprep.subr.bf16.mxu0 0
    %701 = vmatpush1.bf16.msra.mxu0 0
    %702 = vmatprep.subr.bf16.mxu0 0
    %703 = vmatpush1.bf16.msra.mxu0 0
    %704 = vmatprep.subr.bf16.mxu0 0
    %705 = vmatpush1.bf16.msra.mxu0 0
    %706 = vmatprep.subr.bf16.mxu0 0
    %707 = vmatpush1.bf16.msra.mxu0 0
    %708 = vmatprep.subr.bf16.mxu0 0
    %709 = vmatpush1.bf16.msra.mxu0 0
    %710 = vmatprep.subr.bf16.mxu0 0
    %711 = vmatpush1.bf16.msra.mxu0 0
    %712 = vmatprep.subr.bf16.mxu0 0
    %713 = vmatpush1.bf16.msra.mxu0 0
    %714 = vmatprep.subr.bf16.mxu0 0
    %715 = vmatpush1.bf16.msra.mxu0 0
    %716 = vmatprep.subr.bf16.mxu0 0
    %717 = vmatpush1.bf16.msra.mxu0 0
    %718 = vmatprep.subr.bf16.mxu0 0
    %719 = vmatpush1.bf16.msra.mxu0 0
    %720 = vmatprep.subr.bf16.mxu0 0
    %721 = vmatpush1.bf16.msra.mxu0 0
    %722 = vmatprep.subr.bf16.mxu0 0
    %723 = vmatpush1.bf16.msra.mxu0 0
    %724 = vmatprep.subr.bf16.mxu0 0
    %725 = vmatpush1.bf16.msra.mxu0 0
    %726 = vmatprep.mubr.bf16.mxu0 0
    %727 = vmatmul.mubr.bf16.gmra.mrb[0].mxu0 %v632
    %v728 = vpop.f32.mrb[0].mxu0
    %v729 = vadd.f32 %v553, %v728
    %v730 = vpop.f32.mrb[0].mxu0
    %v731 = vadd.f32 %v553, %v730
    %v732 = vpop.f32.mrb[0].mxu0
    %v733 = vpop.f32.mrb[0].mxu0
    %734 = vdwg.mxu0
    %735 = vmatprep.subr.bf16.mxu0 %v605
    %736 = vmatpush1.bf16.msra.mxu0 %v604
    %737 = vmatprep.subr.bf16.mxu0 %v611
    %738 = vmatpush1.bf16.msra.mxu0 %v610
    %739 = vmatprep.subr.bf16.mxu0 %v651
    %740 = vmatpush1.bf16.msra.mxu0 %v648
    %741 = vmatprep.subr.bf16.mxu0 0
    %742 = vmatpush1.bf16.msra.mxu0 0
    %743 = vmatprep.subr.bf16.mxu0 0
    %744 = vmatpush1.bf16.msra.mxu0 0
    %745 = vmatprep.subr.bf16.mxu0 0
    %746 = vmatpush1.bf16.msra.mxu0 0
    %747 = vmatprep.subr.bf16.mxu0 0
    %748 = vmatpush1.bf16.msra.mxu0 0
    %749 = vmatprep.subr.bf16.mxu0 0
    %750 = vmatpush1.bf16.msra.mxu0 0
    %751 = vmatprep.subr.bf16.mxu0 0
    %752 = vmatpush1.bf16.msra.mxu0 0
    %753 = vmatprep.subr.bf16.mxu0 0
    %754 = vmatpush1.bf16.msra.mxu0 0
    %755 = vmatprep.subr.bf16.mxu0 0
    %756 = vmatpush1.bf16.msra.mxu0 0
    %757 = vmatprep.subr.bf16.mxu0 0
    %758 = vmatpush1.bf16.msra.mxu0 0
    %759 = vmatprep.subr.bf16.mxu0 0
    %760 = vmatpush1.bf16.msra.mxu0 0
    %761 = vmatprep.subr.bf16.mxu0 0
    %762 = vmatpush1.bf16.msra.mxu0 0
    %763 = vmatprep.subr.bf16.mxu0 0
    %764 = vmatpush1.bf16.msra.mxu0 0
    %765 = vmatprep.subr.bf16.mxu0 0
    %766 = vmatpush1.bf16.msra.mxu0 0
    %767 = vmatprep.mubr.bf16.mxu0 0
    %768 = vmatmul.mubr.bf16.gmra.mrb[0].mxu0 %v632
    %v769 = vpop.f32.mrb[0].mxu0
    %v770 = vadd.f32 %v553, %v769
    %v771 = vpop.f32.mrb[0].mxu0
    %v772 = vadd.f32 %v553, %v771
    %v773 = vpop.f32.mrb[0].mxu0
    %v774 = vpop.f32.mrb[0].mxu0
    %775 = vdwg.mxu0
    %776 = vst [vmem:[#allocation6] sm:$0xff] %v688
    %777 = vst [vmem:[#allocation6 + $0x8] sm:$0xff] %v690
    %778 = vst [vmem:[#allocation6 + $0x10] sm:$0xff] %v729
    %779 = vst [vmem:[#allocation6 + $0x18] sm:$0xff] %v731
    %780 = vst [vmem:[#allocation6 + $0x20] sm:$0xff] %v770
    %781 = vst [vmem:[#allocation6 + $0x28] sm:$0xff] %v772
    // Predicated region
    $region18: #{tpu_custom_call.1} parent=1 // pred_check
      _
    $region19: #{tpu_custom_call.1} parent=1 // pred_check_branch
      %783 = sbr.rel (0) target = $region21
    $region20: #{tpu_custom_call.1} parent=1 // pred_region
      %s785 = ssub.s32 768, 768
      %786 = vsyncadd [#allocation5], %s785
      %s788 = sshll.u32 [#allocation6], 4
      %s789 = int_to_ptr.vmem [resolvable:$true] %s788
      %791 = dma.vmem_to_hbm [thread:$0]  %s789, 768, %s3, [#allocation5]
    $region21: #{tpu_custom_call.1} parent=1 // pred_fallthru
      _
    // Predicated region
    $region22: #{tpu_custom_call.1} parent=1 // pred_check
      _
    $region23: #{tpu_custom_call.1} parent=1 // pred_check_branch
      %793 = sbr.rel (0) target = $region25
    $region24: #{tpu_custom_call.1} parent=1 // pred_region
      %794 = dma.done [#allocation5], 768
    $region25: #{tpu_custom_call.1} parent=1 // pred_fallthru
      _
    %795 = vsyncpa [#allocation4], 1
    %796 = vsyncpa [#allocation5], 1

</llo_original>
